<compile_context>
chip_gen: v6e
topology: v6e:2x2x1
jax: 0.10.0
libtpu: 0.0.40
codegen_flags: <defaults>
</compile_context>

<pallas_src>
import jax
import jax.numpy as jnp
from jax.experimental import pallas as pl
from jax.experimental.pallas import tpu as pltpu


_LANE = 128     # lane width: padding target for feature/output dims
_SUBLANE = 8    # f32 sublane width


def _round_up(n, m):
    return ((n + m - 1) // m) * m


def _cdiv(a, b):
    return (a + b - 1) // b


def _sigmoid(h):
    # Single EUP push per element (tanh), exact (no approx reciprocal).
    return 0.5 * (jnp.tanh(0.5 * h) + 1.0)


def _mlp_sig_kernel(x_ref, w1_ref, b1_ref, w2_ref, b2_ref, w3_ref, b3_ref, o_ref):
    w_dtype = w1_ref.dtype

    # Layer 1: Linear + Sigmoid (MXU matmul, f32 accumulation; bias/sigmoid in f32)
    h1 = jnp.dot(x_ref[...], w1_ref[...], preferred_element_type=jnp.float32)
    h1 = _sigmoid(h1 + b1_ref[...])                 # b1 is [1, C1p], broadcasts

    # Layer 2: Linear + Sigmoid
    h2 = jnp.dot(h1.astype(w_dtype), w2_ref[...], preferred_element_type=jnp.float32)
    h2 = _sigmoid(h2 + b2_ref[...])

    # Layer 3: Linear (no activation)
    out = jnp.dot(h2.astype(w_dtype), w3_ref[...], preferred_element_type=jnp.float32)
    o_ref[...] = (out + b3_ref[...]).astype(o_ref.dtype)


def _vmem_limit_bytes(vmem_est):
    """Generation-aware VMEM scoped limit."""
    try:
        cap = int(pltpu.get_tpu_info().vmem_capacity_bytes)
    except Exception:
        cap = 64 * 1024 * 1024
    if cap >= 100 * 1024 * 1024:
        ceiling = 100 * 1024 * 1024          # v5e/v6e: 128 MiB physical
    else:
        ceiling = 52 * 1024 * 1024           # v7x: 64 MiB physical, leave headroom
    return int(min(ceiling, max(32 * 1024 * 1024, 2 * vmem_est)))


def mlp_sig_forward(x, params, *, block_b=256, operand_dtype=None, out_dtype=None):
    """Run the fused MLP kernel.

    x:             [B, D_in] float32
    params:        dict with w1 [D_in,C1], b1 [C1], w2 [C1,C2], b2 [C2],
                   w3 [C2,T], b3 [T]   (weights already transposed vs PyTorch)
    block_b:       target batch rows per grid step (clamped / rounded internally)
    operand_dtype: dtype for streamed x / weights.  None -> bf16 when x is f32
                   (accumulation, bias add and sigmoid stay float32).
    out_dtype:     output dtype (None -> float32).
    """
    w1, b1 = params["w1"], params["b1"]
    w2, b2 = params["w2"], params["b2"]
    w3, b3 = params["w3"], params["b3"]

    B, D_in = x.shape
    C1 = w1.shape[1]
    C2 = w2.shape[1]
    T = w3.shape[1]

    if operand_dtype is None:
        op_dtype = jnp.bfloat16 if x.dtype == jnp.float32 else x.dtype
    else:
        op_dtype = jnp.dtype(operand_dtype)
    o_dtype = jnp.float32 if out_dtype is None else jnp.dtype(out_dtype)

    # ---- Pad feature/output dims to the lane width (lane-dense stores, full
    # vregs / MXU columns). ----
    Dp = _round_up(D_in, _LANE)
    C1p = _round_up(C1, _LANE)
    C2p = _round_up(C2, _LANE)
    Tp = _round_up(T, _LANE)

    # ---- Batch tile: sublane multiple depends on operand packing (8 f32 /
    # 16 bf16 / 32 int8-fp8); prefer large tiles, but keep >=2 grid steps when
    # the batch allows so v7x megacore splits the "parallel" axis. ----
    sub = max(_SUBLANE, 32 // jnp.dtype(op_dtype).itemsize)
    B_aligned = _round_up(B, sub)
    tb = min(_round_up(max(block_b, sub), sub), B_aligned)
    if B_aligned // tb < 2 and B_aligned >= 2 * sub:
        tb = _round_up(_cdiv(B_aligned, 2), sub)
    num_tiles = _cdiv(B_aligned, tb)
    Bp = num_tiles * tb

    # ---- Pad only when actually misaligned (jnp.pad so XLA can fuse). ----
    def prep(a, rows, cols, dtype):
        a = a.astype(dtype)
        pr, pc = rows - a.shape[0], cols - a.shape[1]
        if pr or pc:
            a = jnp.pad(a, ((0, pr), (0, pc)))
        return a

    xp = prep(x, Bp, Dp, op_dtype)
    w1p = prep(w1, Dp, C1p, op_dtype)
    w2p = prep(w2, C1p, C2p, op_dtype)
    w3p = prep(w3, C2p, Tp, op_dtype)
    # Biases stay f32 ([1, N] rows) — added after the f32 accumulation.  Zero
    # padding keeps padded activation lanes from contributing (w2/w3 padded rows
    # are zero), so numerics match the unpadded model exactly.
    b1p = prep(b1.reshape(1, -1), 1, C1p, jnp.float32)
    b2p = prep(b2.reshape(1, -1), 1, C2p, jnp.float32)
    b3p = prep(b3.reshape(1, -1), 1, Tp, jnp.float32)

    bytesz = jnp.dtype(op_dtype).itemsize
    out_bytes = jnp.dtype(o_dtype).itemsize
    cost = pl.CostEstimate(
        flops=2 * Bp * (Dp * C1p + C1p * C2p + C2p * Tp),
        transcendentals=Bp * (C1p + C2p),            # one tanh per activation
        bytes_accessed=(Bp * Dp + Dp * C1p + C1p * C2p + C2p * Tp) * bytesz
        + Bp * Tp * out_bytes
        + (C1p + C2p + Tp) * 4,
    )

    # Rough VMEM budget: double-buffered x/out tiles + (single-buffered)
    # resident weights/biases + f32 intermediates.
    weight_bytes = (Dp * C1p + C1p * C2p + C2p * Tp) * bytesz
    bias_bytes = (C1p + C2p + Tp) * 4
    vmem_est = (
        2 * tb * Dp * bytesz
        + 2 * tb * Tp * out_bytes
        + weight_bytes + bias_bytes
        + 4 * tb * max(C1p, C2p) * 4
    )
    vmem_limit = _vmem_limit_bytes(vmem_est)

    def build_call(single_buffer_consts):
        def const_spec(a):
            if single_buffer_consts:
                # Constant-index blocks are never re-fetched: single buffer.
                return pl.BlockSpec(a.shape, lambda i: (0, 0),
                                    pipeline_mode=pl.Buffered(1))
            return pl.BlockSpec(a.shape, lambda i: (0, 0))

        return pl.pallas_call(
            _mlp_sig_kernel,
            out_shape=jax.ShapeDtypeStruct((Bp, Tp), o_dtype),
            grid=(num_tiles,),
            in_specs=[
                pl.BlockSpec((tb, Dp), lambda i: (i, 0)),   # streamed batch tile
                const_spec(w1p), const_spec(b1p),
                const_spec(w2p), const_spec(b2p),
                const_spec(w3p), const_spec(b3p),
            ],
            out_specs=pl.BlockSpec((tb, Tp), lambda i: (i, 0)),
            compiler_params=pltpu.CompilerParams(
                dimension_semantics=("parallel",),
                vmem_limit_bytes=vmem_limit,
            ),
            cost_estimate=cost,
        )

    try:
        out_padded = jax.block_until_ready(
            build_call(True)(xp, w1p, b1p, w2p, b2p, w3p, b3p)
        )
    except Exception:
        # Fallback: default (2-deep) buffering on the constant blocks.
        out_padded = build_call(False)(xp, w1p, b1p, w2p, b2p, w3p, b3p)

    return out_padded[:B, :T]


def init_params(key, num_dados_entrada, neuronios_c1, neuronios_c2, num_targets):
    """Deterministic init matching nn.Linear shapes (weights stored transposed)."""
    ks = jax.random.split(key, 6)

    def linear(kw, kb, fan_in, fan_out):
        bound = 1.0 / jnp.sqrt(fan_in)
        # PyTorch stores W as [out, in]; we store W.T = [in, out].
        w = jax.random.uniform(kw, (fan_in, fan_out), jnp.float32, -bound, bound)
        b = jax.random.uniform(kb, (fan_out,), jnp.float32, -bound, bound)
        return w, b

    w1, b1 = linear(ks[0], ks[1], num_dados_entrada, neuronios_c1)
    w2, b2 = linear(ks[2], ks[3], neuronios_c1, neuronios_c2)
    w3, b3 = linear(ks[4], ks[5], neuronios_c2, num_targets)
    return {"w1": w1, "b1": b1, "w2": w2, "b2": b2, "w3": w3, "b3": b3}


def _reference(x, p):
    hp = jax.lax.Precision.HIGHEST
    h1 = jax.nn.sigmoid(jnp.dot(x, p["w1"], precision=hp) + p["b1"])
    h2 = jax.nn.sigmoid(jnp.dot(h1, p["w2"], precision=hp) + p["b2"])
    return jnp.dot(h2, p["w3"], precision=hp) + p["b3"]


if __name__ == "__main__":
    # Small shapes: batch=8, num_dados_entrada=16, c1=32, c2=32, num_targets=4
    B, D_IN, C1, C2, T = 8, 16, 32, 32, 4

    key = jax.random.PRNGKey(0)
    kx, kp = jax.random.split(key)

    params = init_params(kp, D_IN, C1, C2, T)
    x = jax.random.normal(kx, (B, D_IN), jnp.float32)

    ref = _reference(x, params)

    # f32 operand path: exact tanh-form sigmoid -> tight tolerance.
    out_f32 = jax.block_until_ready(
        mlp_sig_forward(x, params, operand_dtype=jnp.float32)
    )
    assert out_f32.shape == (B, T), out_f32.shape
    assert jnp.allclose(out_f32, ref, atol=1e-3, rtol=1e-3), float(
        jnp.max(jnp.abs(out_f32 - ref))
    )

    # Default path: bf16 operand streaming with f32 accumulation.
    out = jax.block_until_ready(mlp_sig_forward(x, params))
    assert out.shape == (B, T), out.shape
    assert jnp.allclose(out, ref, atol=5e-2, rtol=5e-2), float(
        jnp.max(jnp.abs(out - ref))
    )

    print("KERNEL_OK")
</pallas_src>

<mosaic_0001>
module attributes {stable_mosaic.version = 11 : i64} {
  func.func @_mlp_sig_kernel(%arg0: i32, %arg1: memref<8x128xf32, #tpu.memory_space<vmem>>, %arg2: memref<128x128xf32, #tpu.memory_space<vmem>>, %arg3: memref<1x128xf32, #tpu.memory_space<vmem>>, %arg4: memref<128x128xf32, #tpu.memory_space<vmem>>, %arg5: memref<1x128xf32, #tpu.memory_space<vmem>>, %arg6: memref<128x128xf32, #tpu.memory_space<vmem>>, %arg7: memref<1x128xf32, #tpu.memory_space<vmem>>, %arg8: memref<8x128xf32, #tpu.memory_space<vmem>>) attributes {dimension_semantics = [#tpu.dimension_semantics<parallel>], iteration_bounds = array<i64: 1>, scalar_prefetch = 0 : i64, scratch_operands = 0 : i64, tpu.core_type = #tpu.core_type<tc>, window_params = [{transform_indices = @transform_0, window_bounds = array<i64: 8, 128>}, {pipeline_mode = #tpu.pipeline_mode<synchronous>, transform_indices = @transform_1, window_bounds = array<i64: 128, 128>}, {pipeline_mode = #tpu.pipeline_mode<synchronous>, transform_indices = @transform_2, window_bounds = array<i64: 1, 128>}, {pipeline_mode = #tpu.pipeline_mode<synchronous>, transform_indices = @transform_3, window_bounds = array<i64: 128, 128>}, {pipeline_mode = #tpu.pipeline_mode<synchronous>, transform_indices = @transform_4, window_bounds = array<i64: 1, 128>}, {pipeline_mode = #tpu.pipeline_mode<synchronous>, transform_indices = @transform_5, window_bounds = array<i64: 128, 128>}, {pipeline_mode = #tpu.pipeline_mode<synchronous>, transform_indices = @transform_6, window_bounds = array<i64: 1, 128>}, {transform_indices = @transform_7, window_bounds = array<i64: 8, 128>}]} {
    %c0 = arith.constant 0 : index
    %c0_0 = arith.constant 0 : index
    %0 = vector.load %arg1[%c0, %c0_0] : memref<8x128xf32, #tpu.memory_space<vmem>>, vector<8x128xf32>
    %c0_1 = arith.constant 0 : index
    %c0_2 = arith.constant 0 : index
    %1 = vector.load %arg2[%c0_1, %c0_2] : memref<128x128xf32, #tpu.memory_space<vmem>>, vector<128x128xf32>
    %cst = arith.constant dense<0.000000e+00> : vector<8x128xf32>
    %2 = tpu.matmul %0, %1, %cst {dimension_numbers = #tpu.dot_dimension_numbers<[1], [0], [0], [1], [0, 0, 1, 1], [], []>} : vector<8x128xf32>, vector<128x128xf32>, vector<8x128xf32> -> vector<8x128xf32>
    %c0_3 = arith.constant 0 : index
    %c0_4 = arith.constant 0 : index
    %3 = vector.load %arg3[%c0_3, %c0_4] : memref<1x128xf32, #tpu.memory_space<vmem>>, vector<1x128xf32>
    %4 = vector.broadcast %3 : vector<1x128xf32> to vector<8x128xf32>
    %5 = arith.addf %2, %4 : vector<8x128xf32>
    %cst_5 = arith.constant 5.000000e-01 : f32
    %6 = vector.broadcast %cst_5 : f32 to vector<8x128xf32>
    %7 = arith.mulf %6, %5 : vector<8x128xf32>
    %8 = math.tanh %7 : vector<8x128xf32>
    %cst_6 = arith.constant 1.000000e+00 : f32
    %9 = vector.broadcast %cst_6 : f32 to vector<8x128xf32>
    %10 = arith.addf %8, %9 : vector<8x128xf32>
    %cst_7 = arith.constant 5.000000e-01 : f32
    %11 = vector.broadcast %cst_7 : f32 to vector<8x128xf32>
    %12 = arith.mulf %11, %10 : vector<8x128xf32>
    %c0_8 = arith.constant 0 : index
    %c0_9 = arith.constant 0 : index
    %13 = vector.load %arg4[%c0_8, %c0_9] : memref<128x128xf32, #tpu.memory_space<vmem>>, vector<128x128xf32>
    %cst_10 = arith.constant dense<0.000000e+00> : vector<8x128xf32>
    %14 = tpu.matmul %12, %13, %cst_10 {dimension_numbers = #tpu.dot_dimension_numbers<[1], [0], [0], [1], [0, 0, 1, 1], [], []>} : vector<8x128xf32>, vector<128x128xf32>, vector<8x128xf32> -> vector<8x128xf32>
    %c0_11 = arith.constant 0 : index
    %c0_12 = arith.constant 0 : index
    %15 = vector.load %arg5[%c0_11, %c0_12] : memref<1x128xf32, #tpu.memory_space<vmem>>, vector<1x128xf32>
    %16 = vector.broadcast %15 : vector<1x128xf32> to vector<8x128xf32>
    %17 = arith.addf %14, %16 : vector<8x128xf32>
    %cst_13 = arith.constant 5.000000e-01 : f32
    %18 = vector.broadcast %cst_13 : f32 to vector<8x128xf32>
    %19 = arith.mulf %18, %17 : vector<8x128xf32>
    %20 = math.tanh %19 : vector<8x128xf32>
    %cst_14 = arith.constant 1.000000e+00 : f32
    %21 = vector.broadcast %cst_14 : f32 to vector<8x128xf32>
    %22 = arith.addf %20, %21 : vector<8x128xf32>
    %cst_15 = arith.constant 5.000000e-01 : f32
    %23 = vector.broadcast %cst_15 : f32 to vector<8x128xf32>
    %24 = arith.mulf %23, %22 : vector<8x128xf32>
    %c0_16 = arith.constant 0 : index
    %c0_17 = arith.constant 0 : index
    %25 = vector.load %arg6[%c0_16, %c0_17] : memref<128x128xf32, #tpu.memory_space<vmem>>, vector<128x128xf32>
    %cst_18 = arith.constant dense<0.000000e+00> : vector<8x128xf32>
    %26 = tpu.matmul %24, %25, %cst_18 {dimension_numbers = #tpu.dot_dimension_numbers<[1], [0], [0], [1], [0, 0, 1, 1], [], []>} : vector<8x128xf32>, vector<128x128xf32>, vector<8x128xf32> -> vector<8x128xf32>
    %c0_19 = arith.constant 0 : index
    %c0_20 = arith.constant 0 : index
    %27 = vector.load %arg7[%c0_19, %c0_20] : memref<1x128xf32, #tpu.memory_space<vmem>>, vector<1x128xf32>
    %28 = vector.broadcast %27 : vector<1x128xf32> to vector<8x128xf32>
    %29 = arith.addf %26, %28 : vector<8x128xf32>
    %c0_21 = arith.constant 0 : index
    %c0_22 = arith.constant 0 : index
    %30 = vector.load %arg8[%c0_21, %c0_22] : memref<8x128xf32, #tpu.memory_space<vmem>>, vector<8x128xf32>
    tpu.vector_store %arg8[%c0_21, %c0_22], %29 {strides = array<i32>} : memref<8x128xf32, #tpu.memory_space<vmem>>, vector<8x128xf32>,
    return
  }
  func.func @transform_0(%arg0: i32) -> (i32, i32) {
    %c0_i32 = arith.constant 0 : i32
    %c0_i32_0 = arith.constant 0 : i32
    return %arg0, %c0_i32 : i32, i32
  }
  func.func @transform_1(%arg0: i32) -> (i32, i32) {
    %c0_i32 = arith.constant 0 : i32
    %c0_i32_0 = arith.constant 0 : i32
    %c0_i32_1 = arith.constant 0 : i32
    return %c0_i32, %c0_i32_0 : i32, i32
  }
  func.func @transform_2(%arg0: i32) -> (i32, i32) {
    %c0_i32 = arith.constant 0 : i32
    %c0_i32_0 = arith.constant 0 : i32
    %c0_i32_1 = arith.constant 0 : i32
    return %c0_i32, %c0_i32_0 : i32, i32
  }
  func.func @transform_3(%arg0: i32) -> (i32, i32) {
    %c0_i32 = arith.constant 0 : i32
    %c0_i32_0 = arith.constant 0 : i32
    %c0_i32_1 = arith.constant 0 : i32
    return %c0_i32, %c0_i32_0 : i32, i32
  }
  func.func @transform_4(%arg0: i32) -> (i32, i32) {
    %c0_i32 = arith.constant 0 : i32
    %c0_i32_0 = arith.constant 0 : i32
    %c0_i32_1 = arith.constant 0 : i32
    return %c0_i32, %c0_i32_0 : i32, i32
  }
  func.func @transform_5(%arg0: i32) -> (i32, i32) {
    %c0_i32 = arith.constant 0 : i32
    %c0_i32_0 = arith.constant 0 : i32
    %c0_i32_1 = arith.constant 0 : i32
    return %c0_i32, %c0_i32_0 : i32, i32
  }
  func.func @transform_6(%arg0: i32) -> (i32, i32) {
    %c0_i32 = arith.constant 0 : i32
    %c0_i32_0 = arith.constant 0 : i32
    %c0_i32_1 = arith.constant 0 : i32
    return %c0_i32, %c0_i32_0 : i32, i32
  }
  func.func @transform_7(%arg0: i32) -> (i32, i32) {
    %c0_i32 = arith.constant 0 : i32
    %c0_i32_0 = arith.constant 0 : i32
    return %arg0, %c0_i32 : i32, i32
  }
}

module attributes {stable_mosaic.version = 11 : i64} {
  func.func @_mlp_sig_kernel(%arg0: i32, %arg1: memref<8x128xf32, #tpu.memory_space<vmem>>, %arg2: memref<128x128xf32, #tpu.memory_space<vmem>>, %arg3: memref<1x128xf32, #tpu.memory_space<vmem>>, %arg4: memref<128x128xf32, #tpu.memory_space<vmem>>, %arg5: memref<1x128xf32, #tpu.memory_space<vmem>>, %arg6: memref<128x128xf32, #tpu.memory_space<vmem>>, %arg7: memref<1x128xf32, #tpu.memory_space<vmem>>, %arg8: memref<8x128xf32, #tpu.memory_space<vmem>>) attributes {dimension_semantics = [#tpu.dimension_semantics<parallel>], iteration_bounds = array<i64: 1>, scalar_prefetch = 0 : i64, scratch_operands = 0 : i64, tpu.core_type = #tpu.core_type<tc>, window_params = [{transform_indices = @transform_0, window_bounds = array<i64: 8, 128>}, {pipeline_mode = #tpu.pipeline_mode<synchronous>, transform_indices = @transform_1, window_bounds = array<i64: 128, 128>}, {pipeline_mode = #tpu.pipeline_mode<synchronous>, transform_indices = @transform_2, window_bounds = array<i64: 1, 128>}, {pipeline_mode = #tpu.pipeline_mode<synchronous>, transform_indices = @transform_3, window_bounds = array<i64: 128, 128>}, {pipeline_mode = #tpu.pipeline_mode<synchronous>, transform_indices = @transform_4, window_bounds = array<i64: 1, 128>}, {pipeline_mode = #tpu.pipeline_mode<synchronous>, transform_indices = @transform_5, window_bounds = array<i64: 128, 128>}, {pipeline_mode = #tpu.pipeline_mode<synchronous>, transform_indices = @transform_6, window_bounds = array<i64: 1, 128>}, {transform_indices = @transform_7, window_bounds = array<i64: 8, 128>}]} {
    %c0 = arith.constant 0 : index
    %c0_0 = arith.constant 0 : index
    %0 = vector.load %arg1[%c0, %c0_0] : memref<8x128xf32, #tpu.memory_space<vmem>>, vector<8x128xf32>
    %c0_1 = arith.constant 0 : index
    %c0_2 = arith.constant 0 : index
    %1 = vector.load %arg2[%c0_1, %c0_2] : memref<128x128xf32, #tpu.memory_space<vmem>>, vector<128x128xf32>
    %cst = arith.constant dense<0.000000e+00> : vector<8x128xf32>
    %2 = tpu.matmul %0, %1, %cst {dimension_numbers = #tpu.dot_dimension_numbers<[1], [0], [0], [1], [0, 0, 1, 1], [], []>} : vector<8x128xf32>, vector<128x128xf32>, vector<8x128xf32> -> vector<8x128xf32>
    %c0_3 = arith.constant 0 : index
    %c0_4 = arith.constant 0 : index
    %3 = vector.load %arg3[%c0_3, %c0_4] : memref<1x128xf32, #tpu.memory_space<vmem>>, vector<1x128xf32>
    %4 = vector.broadcast %3 : vector<1x128xf32> to vector<8x128xf32>
    %5 = arith.addf %2, %4 : vector<8x128xf32>
    %cst_5 = arith.constant 5.000000e-01 : f32
    %6 = vector.broadcast %cst_5 : f32 to vector<8x128xf32>
    %7 = arith.mulf %6, %5 : vector<8x128xf32>
    %8 = math.tanh %7 : vector<8x128xf32>
    %cst_6 = arith.constant 1.000000e+00 : f32
    %9 = vector.broadcast %cst_6 : f32 to vector<8x128xf32>
    %10 = arith.addf %8, %9 : vector<8x128xf32>
    %cst_7 = arith.constant 5.000000e-01 : f32
    %11 = vector.broadcast %cst_7 : f32 to vector<8x128xf32>
    %12 = arith.mulf %11, %10 : vector<8x128xf32>
    %c0_8 = arith.constant 0 : index
    %c0_9 = arith.constant 0 : index
    %13 = vector.load %arg4[%c0_8, %c0_9] : memref<128x128xf32, #tpu.memory_space<vmem>>, vector<128x128xf32>
    %cst_10 = arith.constant dense<0.000000e+00> : vector<8x128xf32>
    %14 = tpu.matmul %12, %13, %cst_10 {dimension_numbers = #tpu.dot_dimension_numbers<[1], [0], [0], [1], [0, 0, 1, 1], [], []>} : vector<8x128xf32>, vector<128x128xf32>, vector<8x128xf32> -> vector<8x128xf32>
    %c0_11 = arith.constant 0 : index
    %c0_12 = arith.constant 0 : index
    %15 = vector.load %arg5[%c0_11, %c0_12] : memref<1x128xf32, #tpu.memory_space<vmem>>, vector<1x128xf32>
    %16 = vector.broadcast %15 : vector<1x128xf32> to vector<8x128xf32>
    %17 = arith.addf %14, %16 : vector<8x128xf32>
    %cst_13 = arith.constant 5.000000e-01 : f32
    %18 = vector.broadcast %cst_13 : f32 to vector<8x128xf32>
    %19 = arith.mulf %18, %17 : vector<8x128xf32>
    %20 = math.tanh %19 : vector<8x128xf32>
    %cst_14 = arith.constant 1.000000e+00 : f32
    %21 = vector.broadcast %cst_14 : f32 to vector<8x128xf32>
    %22 = arith.addf %20, %21 : vector<8x128xf32>
    %cst_15 = arith.constant 5.000000e-01 : f32
    %23 = vector.broadcast %cst_15 : f32 to vector<8x128xf32>
    %24 = arith.mulf %23, %22 : vector<8x128xf32>
    %c0_16 = arith.constant 0 : index
    %c0_17 = arith.constant 0 : index
    %25 = vector.load %arg6[%c0_16, %c0_17] : memref<128x128xf32, #tpu.memory_space<vmem>>, vector<128x128xf32>
    %cst_18 = arith.constant dense<0.000000e+00> : vector<8x128xf32>
    %26 = tpu.matmul %24, %25, %cst_18 {dimension_numbers = #tpu.dot_dimension_numbers<[1], [0], [0], [1], [0, 0, 1, 1], [], []>} : vector<8x128xf32>, vector<128x128xf32>, vector<8x128xf32> -> vector<8x128xf32>
    %c0_19 = arith.constant 0 : index
    %c0_20 = arith.constant 0 : index
    %27 = vector.load %arg7[%c0_19, %c0_20] : memref<1x128xf32, #tpu.memory_space<vmem>>, vector<1x128xf32>
    %28 = vector.broadcast %27 : vector<1x128xf32> to vector<8x128xf32>
    %29 = arith.addf %26, %28 : vector<8x128xf32>
    %c0_21 = arith.constant 0 : index
    %c0_22 = arith.constant 0 : index
    %30 = vector.load %arg8[%c0_21, %c0_22] : memref<8x128xf32, #tpu.memory_space<vmem>>, vector<8x128xf32>
    tpu.vector_store %arg8[%c0_21, %c0_22], %29 {strides = array<i32>} : memref<8x128xf32, #tpu.memory_space<vmem>>, vector<8x128xf32>,
    return
  }
  func.func @transform_0(%arg0: i32) -> (i32, i32) {
    %c0_i32 = arith.constant 0 : i32
    %c0_i32_0 = arith.constant 0 : i32
    return %arg0, %c0_i32 : i32, i32
  }
  func.func @transform_1(%arg0: i32) -> (i32, i32) {
    %c0_i32 = arith.constant 0 : i32
    %c0_i32_0 = arith.constant 0 : i32
    %c0_i32_1 = arith.constant 0 : i32
    return %c0_i32, %c0_i32_0 : i32, i32
  }
  func.func @transform_2(%arg0: i32) -> (i32, i32) {
    %c0_i32 = arith.constant 0 : i32
    %c0_i32_0 = arith.constant 0 : i32
    %c0_i32_1 = arith.constant 0 : i32
    return %c0_i32, %c0_i32_0 : i32, i32
  }
  func.func @transform_3(%arg0: i32) -> (i32, i32) {
    %c0_i32 = arith.constant 0 : i32
    %c0_i32_0 = arith.constant 0 : i32
    %c0_i32_1 = arith.constant 0 : i32
    return %c0_i32, %c0_i32_0 : i32, i32
  }
  func.func @transform_4(%arg0: i32) -> (i32, i32) {
    %c0_i32 = arith.constant 0 : i32
    %c0_i32_0 = arith.constant 0 : i32
    %c0_i32_1 = arith.constant 0 : i32
    return %c0_i32, %c0_i32_0 : i32, i32
  }
  func.func @transform_5(%arg0: i32) -> (i32, i32) {
    %c0_i32 = arith.constant 0 : i32
    %c0_i32_0 = arith.constant 0 : i32
    %c0_i32_1 = arith.constant 0 : i32
    return %c0_i32, %c0_i32_0 : i32, i32
  }
  func.func @transform_6(%arg0: i32) -> (i32, i32) {
    %c0_i32 = arith.constant 0 : i32
    %c0_i32_0 = arith.constant 0 : i32
    %c0_i32_1 = arith.constant 0 : i32
    return %c0_i32, %c0_i32_0 : i32, i32
  }
  func.func @transform_7(%arg0: i32) -> (i32, i32) {
    %c0_i32 = arith.constant 0 : i32
    %c0_i32_0 = arith.constant 0 : i32
    return %arg0, %c0_i32 : i32, i32
  }
}

</mosaic_0001>

<llo_original>
// kernel: tpu_custom_call.1
$region0: #{tpu_custom_call.1}
  #allocation0 [shape = 'u32[]', space=smem, size = 0x4, offset = 0x4, fixed_abs, tag = 'smem constant byte address 0x4 - core index']
  #allocation1 [shape = 'u32[144,128]{1,0:T(1,128)}', space=vmem, size = 0x12000, scoped, tag = 'internal scratch']
  %s0 = inlined_call_operand.hbm [shape: f32[8,128], index: 0, kind: input, shape index: {}]
  %s1 = inlined_call_operand.hbm [shape: f32[128,128], index: 1, kind: input, shape index: {}]
  %s2 = inlined_call_operand.vmem [shape: f32[1,128], index: 2, kind: input, shape index: {}]
  %s3 = inlined_call_operand.hbm [shape: f32[128,128], index: 3, kind: input, shape index: {}]
  %s4 = inlined_call_operand.vmem [shape: f32[1,128], index: 4, kind: input, shape index: {}]
  %s5 = inlined_call_operand.hbm [shape: f32[128,128], index: 5, kind: input, shape index: {}]
  %s6 = inlined_call_operand.vmem [shape: f32[1,128], index: 6, kind: input, shape index: {}]
  %s7 = inlined_call_operand.hbm [shape: f32[8,128], index: 7, kind: output, shape index: {}]
  %s8 = sld [smem:[#allocation0]]
  $region54: #{tpu_custom_call.1} parent=0
    _
  %s10 = ssub.s32 1, %s8
  %s11 = scalar_select 0, %s10, %s8
  $region1: #{tpu_custom_call.1} parent=0
    #allocation2 [shape = 'u8[4096]{0}', space=vmem, size = 0x1000, scoped, tag = 'input window, operand 0, single buffered']
    #allocation3 [shape = 's32[1]{0}', space=sflag, size = 0x4, scoped, tag = 'scoped memory for tpu_custom_call.1']
    #allocation4 [shape = 's32[1]{0}', space=sflag, size = 0x4, scoped, tag = 'scoped memory for tpu_custom_call.1']
    #allocation5 [shape = 'u8[65536]{0}', space=vmem, size = 0x10000, scoped, tag = 'input window, operand 1, single buffered']
    #allocation6 [shape = 's32[1]{0}', space=sflag, size = 0x4, scoped, tag = 'scoped memory for tpu_custom_call.1']
    #allocation7 [shape = 'u8[65536]{0}', space=vmem, size = 0x10000, scoped, tag = 'input window, operand 3, single buffered']
    #allocation8 [shape = 'u8[65536]{0}', space=vmem, size = 0x10000, scoped, tag = 'input window, operand 5, single buffered']
    #allocation9 [shape = 's32[1]{0}', space=sflag, size = 0x4, scoped, tag = 'scoped memory for tpu_custom_call.1']
    #allocation10 [shape = 'u8[4096]{0}', space=vmem, size = 0x1000, scoped, tag = 'output window, operand 0, single buffered']
    %12 = vsyncpa [#allocation3], 0
    %13 = vsyncpa [#allocation6], 0
    %14 = vsyncpa [#allocation9], 0
    %15 = vsyncpa [#allocation4], 0
    // Predicated region
    $region2: #{tpu_custom_call.1} parent=1 // pred_check
      _
    $region3: #{tpu_custom_call.1} parent=1 // pred_check_branch
      %17 = sbr.rel (0) target = $region5
    $region4: #{tpu_custom_call.1} parent=1 // pred_region
      %s19 = ssub.s32 128, 128
      %20 = vsyncadd [#allocation3], %s19
      %s22 = sshll.u32 [#allocation2], 4
      %s23 = int_to_ptr.vmem [resolvable:$true] %s22
      %25 = dma.hbm_to_vmem [thread:$0]  %s0, 128, %s23, [#allocation3]
    $region5: #{tpu_custom_call.1} parent=1 // pred_fallthru
      _
    // Predicated region
    $region6: #{tpu_custom_call.1} parent=1 // pred_check
      _
    $region7: #{tpu_custom_call.1} parent=1 // pred_check_branch
      %27 = sbr.rel (0) target = $region9
    $region8: #{tpu_custom_call.1} parent=1 // pred_region
      %s29 = ssub.s32 2048, 2048
      %30 = vsyncadd [#allocation6], %s29
      %s31 = sshll.u32 [#allocation5], 4
      %s32 = int_to_ptr.vmem [resolvable:$true] %s31
      %37 = dma.hbm_to_vmem [thread:$0]  %s1, 2048, %s32, [#allocation6], 128, 128, 8
    $region9: #{tpu_custom_call.1} parent=1 // pred_fallthru
      _
    // Predicated region
    $region10: #{tpu_custom_call.1} parent=1 // pred_check
      _
    $region11: #{tpu_custom_call.1} parent=1 // pred_check_branch
      %39 = sbr.rel (0) target = $region13
    $region12: #{tpu_custom_call.1} parent=1 // pred_region
      _
    $region13: #{tpu_custom_call.1} parent=1 // pred_fallthru
      _
    // Predicated region
    $region14: #{tpu_custom_call.1} parent=1 // pred_check
      _
    $region15: #{tpu_custom_call.1} parent=1 // pred_check_branch
      %41 = sbr.rel (0) target = $region17
    $region16: #{tpu_custom_call.1} parent=1 // pred_region
      %s43 = ssub.s32 2048, 2048
      %44 = vsyncadd [#allocation6], %s43
      %s45 = sshll.u32 [#allocation7], 4
      %s46 = int_to_ptr.vmem [resolvable:$true] %s45
      %51 = dma.hbm_to_vmem [thread:$0]  %s3, 2048, %s46, [#allocation6], 128, 128, 8
    $region17: #{tpu_custom_call.1} parent=1 // pred_fallthru
      _
    // Predicated region
    $region18: #{tpu_custom_call.1} parent=1 // pred_check
      _
    $region19: #{tpu_custom_call.1} parent=1 // pred_check_branch
      %53 = sbr.rel (0) target = $region21
    $region20: #{tpu_custom_call.1} parent=1 // pred_region
      _
    $region21: #{tpu_custom_call.1} parent=1 // pred_fallthru
      _
    // Predicated region
    $region22: #{tpu_custom_call.1} parent=1 // pred_check
      _
    $region23: #{tpu_custom_call.1} parent=1 // pred_check_branch
      %55 = sbr.rel (0) target = $region25
    $region24: #{tpu_custom_call.1} parent=1 // pred_region
      %s57 = ssub.s32 2048, 2048
      %58 = vsyncadd [#allocation9], %s57
      %s59 = sshll.u32 [#allocation8], 4
      %s60 = int_to_ptr.vmem [resolvable:$true] %s59
      %65 = dma.hbm_to_vmem [thread:$0]  %s5, 2048, %s60, [#allocation9], 128, 128, 8
    $region25: #{tpu_custom_call.1} parent=1 // pred_fallthru
      _
    // Predicated region
    $region26: #{tpu_custom_call.1} parent=1 // pred_check
      _
    $region27: #{tpu_custom_call.1} parent=1 // pred_check_branch
      %67 = sbr.rel (0) target = $region29
    $region28: #{tpu_custom_call.1} parent=1 // pred_region
      _
    $region29: #{tpu_custom_call.1} parent=1 // pred_fallthru
      _
    // Predicated region
    $region30: #{tpu_custom_call.1} parent=1 // pred_check
      _
    $region31: #{tpu_custom_call.1} parent=1 // pred_check_branch
      %69 = sbr.rel (0) target = $region33
    $region32: #{tpu_custom_call.1} parent=1 // pred_region
      %70 = dma.done [#allocation3], 128
    $region33: #{tpu_custom_call.1} parent=1 // pred_fallthru
      _
    // Predicated region
    $region34: #{tpu_custom_call.1} parent=1 // pred_check
      _
    $region35: #{tpu_custom_call.1} parent=1 // pred_check_branch
      %72 = sbr.rel (0) target = $region37
    $region36: #{tpu_custom_call.1} parent=1 // pred_region
      %73 = dma.done [#allocation6], 2048
    $region37: #{tpu_custom_call.1} parent=1 // pred_fallthru
      _
    // Predicated region
    $region38: #{tpu_custom_call.1} parent=1 // pred_check
      _
    $region39: #{tpu_custom_call.1} parent=1 // pred_check_branch
      %75 = sbr.rel (0) target = $region41
    $region40: #{tpu_custom_call.1} parent=1 // pred_region
      %76 = dma.done [#allocation6], 2048
    $region41: #{tpu_custom_call.1} parent=1 // pred_fallthru
      _
    // Predicated region
    $region42: #{tpu_custom_call.1} parent=1 // pred_check
      _
    $region43: #{tpu_custom_call.1} parent=1 // pred_check_branch
      %78 = sbr.rel (0) target = $region45
    $region44: #{tpu_custom_call.1} parent=1 // pred_region
      %79 = dma.done [#allocation9], 2048
    $region45: #{tpu_custom_call.1} parent=1 // pred_fallthru
      _
    %v80 = vld [vmem:[#allocation2] sm:$0xff]
    %v81 = vld [vmem:[#allocation5] sm:$0xff]
    %v82 = vld [vmem:[#allocation5 + $0x8] sm:$0xff]
    %v83 = vld [vmem:[#allocation5 + $0x10] sm:$0xff]
    %v84 = vld [vmem:[#allocation5 + $0x18] sm:$0xff]
    %v85 = vld [vmem:[#allocation5 + $0x20] sm:$0xff]
    %v86 = vld [vmem:[#allocation5 + $0x28] sm:$0xff]
    %v87 = vld [vmem:[#allocation5 + $0x30] sm:$0xff]
    %v88 = vld [vmem:[#allocation5 + $0x38] sm:$0xff]
    %v89 = vld [vmem:[#allocation5 + $0x40] sm:$0xff]
    %v90 = vld [vmem:[#allocation5 + $0x48] sm:$0xff]
    %v91 = vld [vmem:[#allocation5 + $0x50] sm:$0xff]
    %v92 = vld [vmem:[#allocation5 + $0x58] sm:$0xff]
    %v93 = vld [vmem:[#allocation5 + $0x60] sm:$0xff]
    %v94 = vld [vmem:[#allocation5 + $0x68] sm:$0xff]
    %v95 = vld [vmem:[#allocation5 + $0x70] sm:$0xff]
    %v96 = vld [vmem:[#allocation5 + $0x78] sm:$0xff]
    %v97 = vld [vmem:[%s2] sm:$0x1]
    %v99 = vlaneseq
    %v100 = vshrl.u32 %v99, 7
    %v101 = vsub.s32 0, %v100
    %v102 = vrot.slane %v97, %v101
    %104 = vmatprep.subr.mxu0 0.0
    %105 = vmatpush1.msra.mxu0 %v96
    %106 = vmatprep.subr.mxu0 0.0
    %107 = vmatpush1.msra.mxu0 %v95
    %108 = vmatprep.subr.mxu0 0.0
    %109 = vmatpush1.msra.mxu0 %v94
    %110 = vmatprep.subr.mxu0 0.0
    %111 = vmatpush1.msra.mxu0 %v93
    %112 = vmatprep.subr.mxu0 0.0
    %113 = vmatpush1.msra.mxu0 %v92
    %114 = vmatprep.subr.mxu0 0.0
    %115 = vmatpush1.msra.mxu0 %v91
    %116 = vmatprep.subr.mxu0 0.0
    %117 = vmatpush1.msra.mxu0 %v90
    %118 = vmatprep.subr.mxu0 0.0
    %119 = vmatpush1.msra.mxu0 %v89
    %120 = vmatprep.subr.mxu0 0.0
    %121 = vmatpush1.msra.mxu0 %v88
    %122 = vmatprep.subr.mxu0 0.0
    %123 = vmatpush1.msra.mxu0 %v87
    %124 = vmatprep.subr.mxu0 0.0
    %125 = vmatpush1.msra.mxu0 %v86
    %126 = vmatprep.subr.mxu0 0.0
    %127 = vmatpush1.msra.mxu0 %v85
    %128 = vmatprep.subr.mxu0 0.0
    %129 = vmatpush1.msra.mxu0 %v84
    %130 = vmatprep.subr.mxu0 0.0
    %131 = vmatpush1.msra.mxu0 %v83
    %132 = vmatprep.subr.mxu0 0.0
    %133 = vmatpush1.msra.mxu0 %v82
    %134 = vmatprep.subr.mxu0 0.0
    %135 = vmatpush1.msra.mxu0 %v81
    %136 = vmatprep.subr.mxu0 0.0
    %137 = vmatpush2.msra.mxu0 0.0
    %138 = vmatprep.subr.mxu0 0.0
    %139 = vmatpush2.msra.mxu0 0.0
    %140 = vmatprep.subr.mxu0 0.0
    %141 = vmatpush2.msra.mxu0 0.0
    %142 = vmatprep.subr.mxu0 0.0
    %143 = vmatpush2.msra.mxu0 0.0
    %144 = vmatprep.subr.mxu0 0.0
    %145 = vmatpush2.msra.mxu0 0.0
    %146 = vmatprep.subr.mxu0 0.0
    %147 = vmatpush2.msra.mxu0 0.0
    %148 = vmatprep.subr.mxu0 0.0
    %149 = vmatpush2.msra.mxu0 0.0
    %150 = vmatprep.subr.mxu0 0.0
    %151 = vmatpush2.msra.mxu0 0.0
    %152 = vmatprep.subr.mxu0 0.0
    %153 = vmatpush2.msra.mxu0 0.0
    %154 = vmatprep.subr.mxu0 0.0
    %155 = vmatpush2.msra.mxu0 0.0
    %156 = vmatprep.subr.mxu0 0.0
    %157 = vmatpush2.msra.mxu0 0.0
    %158 = vmatprep.subr.mxu0 0.0
    %159 = vmatpush2.msra.mxu0 0.0
    %160 = vmatprep.subr.mxu0 0.0
    %161 = vmatpush2.msra.mxu0 0.0
    %162 = vmatprep.subr.mxu0 0.0
    %163 = vmatpush2.msra.mxu0 0.0
    %164 = vmatprep.subr.mxu0 0.0
    %165 = vmatpush2.msra.mxu0 0.0
    %166 = vmatprep.subr.mxu0 0.0
    %167 = vmatpush2.msra.mxu0 0.0
    %168 = vmatprep.mubr.f32.mxu0 0.0
    %169 = vmatmul.mubr.f32.gmra.mxu0 %v80
    %v170 = vpop.f32.mrf.mxu0
    %v171 = vadd.f32 %v102, %v170
    %v172 = vpop.f32.mrf.mxu0
    %173 = vdwg.mxu0
    %v174 = vmul.f32 %v171, 0.5
    %v175 = vtanh.pop %v174
    %v176 = vadd.f32 %v175, 1.0
    %v177 = vmul.f32 %v176, 0.5
    %v178 = vld [vmem:[#allocation7] sm:$0xff]
    %v179 = vld [vmem:[#allocation7 + $0x8] sm:$0xff]
    %v180 = vld [vmem:[#allocation7 + $0x10] sm:$0xff]
    %v181 = vld [vmem:[#allocation7 + $0x18] sm:$0xff]
    %v182 = vld [vmem:[#allocation7 + $0x20] sm:$0xff]
    %v183 = vld [vmem:[#allocation7 + $0x28] sm:$0xff]
    %v184 = vld [vmem:[#allocation7 + $0x30] sm:$0xff]
    %v185 = vld [vmem:[#allocation7 + $0x38] sm:$0xff]
    %v186 = vld [vmem:[#allocation7 + $0x40] sm:$0xff]
    %v187 = vld [vmem:[#allocation7 + $0x48] sm:$0xff]
    %v188 = vld [vmem:[#allocation7 + $0x50] sm:$0xff]
    %v189 = vld [vmem:[#allocation7 + $0x58] sm:$0xff]
    %v190 = vld [vmem:[#allocation7 + $0x60] sm:$0xff]
    %v191 = vld [vmem:[#allocation7 + $0x68] sm:$0xff]
    %v192 = vld [vmem:[#allocation7 + $0x70] sm:$0xff]
    %v193 = vld [vmem:[#allocation7 + $0x78] sm:$0xff]
    %v194 = vld [vmem:[%s4] sm:$0x1]
    %v196 = vlaneseq
    %v197 = vshrl.u32 %v196, 7
    %v198 = vsub.s32 0, %v197
    %v199 = vrot.slane %v194, %v198
    %201 = vmatprep.subr.mxu0 0.0
    %202 = vmatpush1.msra.mxu0 %v193
    %203 = vmatprep.subr.mxu0 0.0
    %204 = vmatpush1.msra.mxu0 %v192
    %205 = vmatprep.subr.mxu0 0.0
    %206 = vmatpush1.msra.mxu0 %v191
    %207 = vmatprep.subr.mxu0 0.0
    %208 = vmatpush1.msra.mxu0 %v190
    %209 = vmatprep.subr.mxu0 0.0
    %210 = vmatpush1.msra.mxu0 %v189
    %211 = vmatprep.subr.mxu0 0.0
    %212 = vmatpush1.msra.mxu0 %v188
    %213 = vmatprep.subr.mxu0 0.0
    %214 = vmatpush1.msra.mxu0 %v187
    %215 = vmatprep.subr.mxu0 0.0
    %216 = vmatpush1.msra.mxu0 %v186
    %217 = vmatprep.subr.mxu0 0.0
    %218 = vmatpush1.msra.mxu0 %v185
    %219 = vmatprep.subr.mxu0 0.0
    %220 = vmatpush1.msra.mxu0 %v184
    %221 = vmatprep.subr.mxu0 0.0
    %222 = vmatpush1.msra.mxu0 %v183
    %223 = vmatprep.subr.mxu0 0.0
    %224 = vmatpush1.msra.mxu0 %v182
    %225 = vmatprep.subr.mxu0 0.0
    %226 = vmatpush1.msra.mxu0 %v181
    %227 = vmatprep.subr.mxu0 0.0
    %228 = vmatpush1.msra.mxu0 %v180
    %229 = vmatprep.subr.mxu0 0.0
    %230 = vmatpush1.msra.mxu0 %v179
    %231 = vmatprep.subr.mxu0 0.0
    %232 = vmatpush1.msra.mxu0 %v178
    %233 = vmatprep.subr.mxu0 0.0
    %234 = vmatpush2.msra.mxu0 0.0
    %235 = vmatprep.subr.mxu0 0.0
    %236 = vmatpush2.msra.mxu0 0.0
    %237 = vmatprep.subr.mxu0 0.0
    %238 = vmatpush2.msra.mxu0 0.0
    %239 = vmatprep.subr.mxu0 0.0
    %240 = vmatpush2.msra.mxu0 0.0
    %241 = vmatprep.subr.mxu0 0.0
    %242 = vmatpush2.msra.mxu0 0.0
    %243 = vmatprep.subr.mxu0 0.0
    %244 = vmatpush2.msra.mxu0 0.0
    %245 = vmatprep.subr.mxu0 0.0
    %246 = vmatpush2.msra.mxu0 0.0
    %247 = vmatprep.subr.mxu0 0.0
    %248 = vmatpush2.msra.mxu0 0.0
    %249 = vmatprep.subr.mxu0 0.0
    %250 = vmatpush2.msra.mxu0 0.0
    %251 = vmatprep.subr.mxu0 0.0
    %252 = vmatpush2.msra.mxu0 0.0
    %253 = vmatprep.subr.mxu0 0.0
    %254 = vmatpush2.msra.mxu0 0.0
    %255 = vmatprep.subr.mxu0 0.0
    %256 = vmatpush2.msra.mxu0 0.0
    %257 = vmatprep.subr.mxu0 0.0
    %258 = vmatpush2.msra.mxu0 0.0
    %259 = vmatprep.subr.mxu0 0.0
    %260 = vmatpush2.msra.mxu0 0.0
    %261 = vmatprep.subr.mxu0 0.0
    %262 = vmatpush2.msra.mxu0 0.0
    %263 = vmatprep.subr.mxu0 0.0
    %264 = vmatpush2.msra.mxu0 0.0
    %265 = vmatprep.mubr.f32.mxu0 0.0
    %266 = vmatmul.mubr.f32.gmra.mxu0 %v177
    %v267 = vpop.f32.mrf.mxu0
    %v268 = vadd.f32 %v199, %v267
    %v269 = vpop.f32.mrf.mxu0
    %270 = vdwg.mxu0
    %v271 = vmul.f32 %v268, 0.5
    %v272 = vtanh.pop %v271
    %v273 = vadd.f32 %v272, 1.0
    %v274 = vmul.f32 %v273, 0.5
    %v275 = vld [vmem:[#allocation8] sm:$0xff]
    %v276 = vld [vmem:[#allocation8 + $0x8] sm:$0xff]
    %v277 = vld [vmem:[#allocation8 + $0x10] sm:$0xff]
    %v278 = vld [vmem:[#allocation8 + $0x18] sm:$0xff]
    %v279 = vld [vmem:[#allocation8 + $0x20] sm:$0xff]
    %v280 = vld [vmem:[#allocation8 + $0x28] sm:$0xff]
    %v281 = vld [vmem:[#allocation8 + $0x30] sm:$0xff]
    %v282 = vld [vmem:[#allocation8 + $0x38] sm:$0xff]
    %v283 = vld [vmem:[#allocation8 + $0x40] sm:$0xff]
    %v284 = vld [vmem:[#allocation8 + $0x48] sm:$0xff]
    %v285 = vld [vmem:[#allocation8 + $0x50] sm:$0xff]
    %v286 = vld [vmem:[#allocation8 + $0x58] sm:$0xff]
    %v287 = vld [vmem:[#allocation8 + $0x60] sm:$0xff]
    %v288 = vld [vmem:[#allocation8 + $0x68] sm:$0xff]
    %v289 = vld [vmem:[#allocation8 + $0x70] sm:$0xff]
    %v290 = vld [vmem:[#allocation8 + $0x78] sm:$0xff]
    %v291 = vld [vmem:[%s6] sm:$0x1]
    %v293 = vlaneseq
    %v294 = vshrl.u32 %v293, 7
    %v295 = vsub.s32 0, %v294
    %v296 = vrot.slane %v291, %v295
    %298 = vmatprep.subr.mxu0 0.0
    %299 = vmatpush1.msra.mxu0 %v290
    %300 = vmatprep.subr.mxu0 0.0
    %301 = vmatpush1.msra.mxu0 %v289
    %302 = vmatprep.subr.mxu0 0.0
    %303 = vmatpush1.msra.mxu0 %v288
    %304 = vmatprep.subr.mxu0 0.0
    %305 = vmatpush1.msra.mxu0 %v287
    %306 = vmatprep.subr.mxu0 0.0
    %307 = vmatpush1.msra.mxu0 %v286
    %308 = vmatprep.subr.mxu0 0.0
    %309 = vmatpush1.msra.mxu0 %v285
    %310 = vmatprep.subr.mxu0 0.0
    %311 = vmatpush1.msra.mxu0 %v284
    %312 = vmatprep.subr.mxu0 0.0
    %313 = vmatpush1.msra.mxu0 %v283
    %314 = vmatprep.subr.mxu0 0.0
    %315 = vmatpush1.msra.mxu0 %v282
    %316 = vmatprep.subr.mxu0 0.0
    %317 = vmatpush1.msra.mxu0 %v281
    %318 = vmatprep.subr.mxu0 0.0
    %319 = vmatpush1.msra.mxu0 %v280
    %320 = vmatprep.subr.mxu0 0.0
    %321 = vmatpush1.msra.mxu0 %v279
    %322 = vmatprep.subr.mxu0 0.0
    %323 = vmatpush1.msra.mxu0 %v278
    %324 = vmatprep.subr.mxu0 0.0
    %325 = vmatpush1.msra.mxu0 %v277
    %326 = vmatprep.subr.mxu0 0.0
    %327 = vmatpush1.msra.mxu0 %v276
    %328 = vmatprep.subr.mxu0 0.0
    %329 = vmatpush1.msra.mxu0 %v275
    %330 = vmatprep.subr.mxu0 0.0
    %331 = vmatpush2.msra.mxu0 0.0
    %332 = vmatprep.subr.mxu0 0.0
    %333 = vmatpush2.msra.mxu0 0.0
    %334 = vmatprep.subr.mxu0 0.0
    %335 = vmatpush2.msra.mxu0 0.0
    %336 = vmatprep.subr.mxu0 0.0
    %337 = vmatpush2.msra.mxu0 0.0
    %338 = vmatprep.subr.mxu0 0.0
    %339 = vmatpush2.msra.mxu0 0.0
    %340 = vmatprep.subr.mxu0 0.0
    %341 = vmatpush2.msra.mxu0 0.0
    %342 = vmatprep.subr.mxu0 0.0
    %343 = vmatpush2.msra.mxu0 0.0
    %344 = vmatprep.subr.mxu0 0.0
    %345 = vmatpush2.msra.mxu0 0.0
    %346 = vmatprep.subr.mxu0 0.0
    %347 = vmatpush2.msra.mxu0 0.0
    %348 = vmatprep.subr.mxu0 0.0
    %349 = vmatpush2.msra.mxu0 0.0
    %350 = vmatprep.subr.mxu0 0.0
    %351 = vmatpush2.msra.mxu0 0.0
    %352 = vmatprep.subr.mxu0 0.0
    %353 = vmatpush2.msra.mxu0 0.0
    %354 = vmatprep.subr.mxu0 0.0
    %355 = vmatpush2.msra.mxu0 0.0
    %356 = vmatprep.subr.mxu0 0.0
    %357 = vmatpush2.msra.mxu0 0.0
    %358 = vmatprep.subr.mxu0 0.0
    %359 = vmatpush2.msra.mxu0 0.0
    %360 = vmatprep.subr.mxu0 0.0
    %361 = vmatpush2.msra.mxu0 0.0
    %362 = vmatprep.mubr.f32.mxu0 0.0
    %363 = vmatmul.mubr.f32.gmra.mxu0 %v274
    %v364 = vpop.f32.mrf.mxu0
    %v365 = vadd.f32 %v296, %v364
    %v366 = vpop.f32.mrf.mxu0
    %367 = vdwg.mxu0
    %368 = vst [vmem:[#allocation10] sm:$0xff] %v365
    // Predicated region
    $region46: #{tpu_custom_call.1} parent=1 // pred_check
      _
    $region47: #{tpu_custom_call.1} parent=1 // pred_check_branch
      %370 = sbr.rel (0) target = $region49
    $region48: #{tpu_custom_call.1} parent=1 // pred_region
      %s372 = ssub.s32 128, 128
      %373 = vsyncadd [#allocation4], %s372
      %s375 = sshll.u32 [#allocation10], 4
      %s376 = int_to_ptr.vmem [resolvable:$true] %s375
      %378 = dma.vmem_to_hbm [thread:$0]  %s376, 128, %s7, [#allocation4]
    $region49: #{tpu_custom_call.1} parent=1 // pred_fallthru
      _
    // Predicated region
    $region50: #{tpu_custom_call.1} parent=1 // pred_check
      _
    $region51: #{tpu_custom_call.1} parent=1 // pred_check_branch
      %380 = sbr.rel (0) target = $region53
    $region52: #{tpu_custom_call.1} parent=1 // pred_region
      %381 = dma.done [#allocation4], 128
    $region53: #{tpu_custom_call.1} parent=1 // pred_fallthru
      _
    %382 = vsyncpa [#allocation3], 1
    %383 = vsyncpa [#allocation6], 1
    %384 = vsyncpa [#allocation9], 1
    %385 = vsyncpa [#allocation4], 1

// kernel: tpu_custom_call.1
$region0: #{tpu_custom_call.1}
  #allocation0 [shape = 'u32[]', space=smem, size = 0x4, offset = 0x4, fixed_abs, tag = 'smem constant byte address 0x4 - core index']
  #allocation1 [shape = 'u32[144,128]{1,0:T(1,128)}', space=vmem, size = 0x12000, scoped, tag = 'internal scratch']
  %s0 = inlined_call_operand.hbm [shape: f32[8,128], index: 0, kind: input, shape index: {}]
  %s1 = inlined_call_operand.hbm [shape: f32[128,128], index: 1, kind: input, shape index: {}]
  %s2 = inlined_call_operand.vmem [shape: f32[1,128], index: 2, kind: input, shape index: {}]
  %s3 = inlined_call_operand.hbm [shape: f32[128,128], index: 3, kind: input, shape index: {}]
  %s4 = inlined_call_operand.vmem [shape: f32[1,128], index: 4, kind: input, shape index: {}]
  %s5 = inlined_call_operand.hbm [shape: f32[128,128], index: 5, kind: input, shape index: {}]
  %s6 = inlined_call_operand.vmem [shape: f32[1,128], index: 6, kind: input, shape index: {}]
  %s7 = inlined_call_operand.hbm [shape: f32[8,128], index: 7, kind: output, shape index: {}]
  %s8 = sld [smem:[#allocation0]]
  $region54: #{tpu_custom_call.1} parent=0
    _
  %s10 = ssub.s32 1, %s8
  %s11 = scalar_select 0, %s10, %s8
  $region1: #{tpu_custom_call.1} parent=0
    #allocation2 [shape = 'u8[4096]{0}', space=vmem, size = 0x1000, scoped, tag = 'input window, operand 0, single buffered']
    #allocation3 [shape = 's32[1]{0}', space=sflag, size = 0x4, scoped, tag = 'scoped memory for tpu_custom_call.1']
    #allocation4 [shape = 's32[1]{0}', space=sflag, size = 0x4, scoped, tag = 'scoped memory for tpu_custom_call.1']
    #allocation5 [shape = 'u8[65536]{0}', space=vmem, size = 0x10000, scoped, tag = 'input window, operand 1, single buffered']
    #allocation6 [shape = 's32[1]{0}', space=sflag, size = 0x4, scoped, tag = 'scoped memory for tpu_custom_call.1']
    #allocation7 [shape = 'u8[65536]{0}', space=vmem, size = 0x10000, scoped, tag = 'input window, operand 3, single buffered']
    #allocation8 [shape = 'u8[65536]{0}', space=vmem, size = 0x10000, scoped, tag = 'input window, operand 5, single buffered']
    #allocation9 [shape = 's32[1]{0}', space=sflag, size = 0x4, scoped, tag = 'scoped memory for tpu_custom_call.1']
    #allocation10 [shape = 'u8[4096]{0}', space=vmem, size = 0x1000, scoped, tag = 'output window, operand 0, single buffered']
    %12 = vsyncpa [#allocation3], 0
    %13 = vsyncpa [#allocation6], 0
    %14 = vsyncpa [#allocation9], 0
    %15 = vsyncpa [#allocation4], 0
    // Predicated region
    $region2: #{tpu_custom_call.1} parent=1 // pred_check
      _
    $region3: #{tpu_custom_call.1} parent=1 // pred_check_branch
      %17 = sbr.rel (0) target = $region5
    $region4: #{tpu_custom_call.1} parent=1 // pred_region
      %s19 = ssub.s32 128, 128
      %20 = vsyncadd [#allocation3], %s19
      %s22 = sshll.u32 [#allocation2], 4
      %s23 = int_to_ptr.vmem [resolvable:$true] %s22
      %25 = dma.hbm_to_vmem [thread:$0]  %s0, 128, %s23, [#allocation3]
    $region5: #{tpu_custom_call.1} parent=1 // pred_fallthru
      _
    // Predicated region
    $region6: #{tpu_custom_call.1} parent=1 // pred_check
      _
    $region7: #{tpu_custom_call.1} parent=1 // pred_check_branch
      %27 = sbr.rel (0) target = $region9
    $region8: #{tpu_custom_call.1} parent=1 // pred_region
      %s29 = ssub.s32 2048, 2048
      %30 = vsyncadd [#allocation6], %s29
      %s31 = sshll.u32 [#allocation5], 4
      %s32 = int_to_ptr.vmem [resolvable:$true] %s31
      %37 = dma.hbm_to_vmem [thread:$0]  %s1, 2048, %s32, [#allocation6], 128, 128, 8
    $region9: #{tpu_custom_call.1} parent=1 // pred_fallthru
      _
    // Predicated region
    $region10: #{tpu_custom_call.1} parent=1 // pred_check
      _
    $region11: #{tpu_custom_call.1} parent=1 // pred_check_branch
      %39 = sbr.rel (0) target = $region13
    $region12: #{tpu_custom_call.1} parent=1 // pred_region
      _
    $region13: #{tpu_custom_call.1} parent=1 // pred_fallthru
      _
    // Predicated region
    $region14: #{tpu_custom_call.1} parent=1 // pred_check
      _
    $region15: #{tpu_custom_call.1} parent=1 // pred_check_branch
      %41 = sbr.rel (0) target = $region17
    $region16: #{tpu_custom_call.1} parent=1 // pred_region
      %s43 = ssub.s32 2048, 2048
      %44 = vsyncadd [#allocation6], %s43
      %s45 = sshll.u32 [#allocation7], 4
      %s46 = int_to_ptr.vmem [resolvable:$true] %s45
      %51 = dma.hbm_to_vmem [thread:$0]  %s3, 2048, %s46, [#allocation6], 128, 128, 8
    $region17: #{tpu_custom_call.1} parent=1 // pred_fallthru
      _
    // Predicated region
    $region18: #{tpu_custom_call.1} parent=1 // pred_check
      _
    $region19: #{tpu_custom_call.1} parent=1 // pred_check_branch
      %53 = sbr.rel (0) target = $region21
    $region20: #{tpu_custom_call.1} parent=1 // pred_region
      _
    $region21: #{tpu_custom_call.1} parent=1 // pred_fallthru
      _
    // Predicated region
    $region22: #{tpu_custom_call.1} parent=1 // pred_check
      _
    $region23: #{tpu_custom_call.1} parent=1 // pred_check_branch
      %55 = sbr.rel (0) target = $region25
    $region24: #{tpu_custom_call.1} parent=1 // pred_region
      %s57 = ssub.s32 2048, 2048
      %58 = vsyncadd [#allocation9], %s57
      %s59 = sshll.u32 [#allocation8], 4
      %s60 = int_to_ptr.vmem [resolvable:$true] %s59
      %65 = dma.hbm_to_vmem [thread:$0]  %s5, 2048, %s60, [#allocation9], 128, 128, 8
    $region25: #{tpu_custom_call.1} parent=1 // pred_fallthru
      _
    // Predicated region
    $region26: #{tpu_custom_call.1} parent=1 // pred_check
      _
    $region27: #{tpu_custom_call.1} parent=1 // pred_check_branch
      %67 = sbr.rel (0) target = $region29
    $region28: #{tpu_custom_call.1} parent=1 // pred_region
      _
    $region29: #{tpu_custom_call.1} parent=1 // pred_fallthru
      _
    // Predicated region
    $region30: #{tpu_custom_call.1} parent=1 // pred_check
      _
    $region31: #{tpu_custom_call.1} parent=1 // pred_check_branch
      %69 = sbr.rel (0) target = $region33
    $region32: #{tpu_custom_call.1} parent=1 // pred_region
      %70 = dma.done [#allocation3], 128
    $region33: #{tpu_custom_call.1} parent=1 // pred_fallthru
      _
    // Predicated region
    $region34: #{tpu_custom_call.1} parent=1 // pred_check
      _
    $region35: #{tpu_custom_call.1} parent=1 // pred_check_branch
      %72 = sbr.rel (0) target = $region37
    $region36: #{tpu_custom_call.1} parent=1 // pred_region
      %73 = dma.done [#allocation6], 2048
    $region37: #{tpu_custom_call.1} parent=1 // pred_fallthru
      _
    // Predicated region
    $region38: #{tpu_custom_call.1} parent=1 // pred_check
      _
    $region39: #{tpu_custom_call.1} parent=1 // pred_check_branch
      %75 = sbr.rel (0) target = $region41
    $region40: #{tpu_custom_call.1} parent=1 // pred_region
      %76 = dma.done [#allocation6], 2048
    $region41: #{tpu_custom_call.1} parent=1 // pred_fallthru
      _
    // Predicated region
    $region42: #{tpu_custom_call.1} parent=1 // pred_check
      _
    $region43: #{tpu_custom_call.1} parent=1 // pred_check_branch
      %78 = sbr.rel (0) target = $region45
    $region44: #{tpu_custom_call.1} parent=1 // pred_region
      %79 = dma.done [#allocation9], 2048
    $region45: #{tpu_custom_call.1} parent=1 // pred_fallthru
      _
    %v80 = vld [vmem:[#allocation2] sm:$0xff]
    %v81 = vld [vmem:[#allocation5] sm:$0xff]
    %v82 = vld [vmem:[#allocation5 + $0x8] sm:$0xff]
    %v83 = vld [vmem:[#allocation5 + $0x10] sm:$0xff]
    %v84 = vld [vmem:[#allocation5 + $0x18] sm:$0xff]
    %v85 = vld [vmem:[#allocation5 + $0x20] sm:$0xff]
    %v86 = vld [vmem:[#allocation5 + $0x28] sm:$0xff]
    %v87 = vld [vmem:[#allocation5 + $0x30] sm:$0xff]
    %v88 = vld [vmem:[#allocation5 + $0x38] sm:$0xff]
    %v89 = vld [vmem:[#allocation5 + $0x40] sm:$0xff]
    %v90 = vld [vmem:[#allocation5 + $0x48] sm:$0xff]
    %v91 = vld [vmem:[#allocation5 + $0x50] sm:$0xff]
    %v92 = vld [vmem:[#allocation5 + $0x58] sm:$0xff]
    %v93 = vld [vmem:[#allocation5 + $0x60] sm:$0xff]
    %v94 = vld [vmem:[#allocation5 + $0x68] sm:$0xff]
    %v95 = vld [vmem:[#allocation5 + $0x70] sm:$0xff]
    %v96 = vld [vmem:[#allocation5 + $0x78] sm:$0xff]
    %v97 = vld [vmem:[%s2] sm:$0x1]
    %v99 = vlaneseq
    %v100 = vshrl.u32 %v99, 7
    %v101 = vsub.s32 0, %v100
    %v102 = vrot.slane %v97, %v101
    %104 = vmatprep.subr.mxu0 0.0
    %105 = vmatpush1.msra.mxu0 %v96
    %106 = vmatprep.subr.mxu0 0.0
    %107 = vmatpush1.msra.mxu0 %v95
    %108 = vmatprep.subr.mxu0 0.0
    %109 = vmatpush1.msra.mxu0 %v94
    %110 = vmatprep.subr.mxu0 0.0
    %111 = vmatpush1.msra.mxu0 %v93
    %112 = vmatprep.subr.mxu0 0.0
    %113 = vmatpush1.msra.mxu0 %v92
    %114 = vmatprep.subr.mxu0 0.0
    %115 = vmatpush1.msra.mxu0 %v91
    %116 = vmatprep.subr.mxu0 0.0
    %117 = vmatpush1.msra.mxu0 %v90
    %118 = vmatprep.subr.mxu0 0.0
    %119 = vmatpush1.msra.mxu0 %v89
    %120 = vmatprep.subr.mxu0 0.0
    %121 = vmatpush1.msra.mxu0 %v88
    %122 = vmatprep.subr.mxu0 0.0
    %123 = vmatpush1.msra.mxu0 %v87
    %124 = vmatprep.subr.mxu0 0.0
    %125 = vmatpush1.msra.mxu0 %v86
    %126 = vmatprep.subr.mxu0 0.0
    %127 = vmatpush1.msra.mxu0 %v85
    %128 = vmatprep.subr.mxu0 0.0
    %129 = vmatpush1.msra.mxu0 %v84
    %130 = vmatprep.subr.mxu0 0.0
    %131 = vmatpush1.msra.mxu0 %v83
    %132 = vmatprep.subr.mxu0 0.0
    %133 = vmatpush1.msra.mxu0 %v82
    %134 = vmatprep.subr.mxu0 0.0
    %135 = vmatpush1.msra.mxu0 %v81
    %136 = vmatprep.subr.mxu0 0.0
    %137 = vmatpush2.msra.mxu0 0.0
    %138 = vmatprep.subr.mxu0 0.0
    %139 = vmatpush2.msra.mxu0 0.0
    %140 = vmatprep.subr.mxu0 0.0
    %141 = vmatpush2.msra.mxu0 0.0
    %142 = vmatprep.subr.mxu0 0.0
    %143 = vmatpush2.msra.mxu0 0.0
    %144 = vmatprep.subr.mxu0 0.0
    %145 = vmatpush2.msra.mxu0 0.0
    %146 = vmatprep.subr.mxu0 0.0
    %147 = vmatpush2.msra.mxu0 0.0
    %148 = vmatprep.subr.mxu0 0.0
    %149 = vmatpush2.msra.mxu0 0.0
    %150 = vmatprep.subr.mxu0 0.0
    %151 = vmatpush2.msra.mxu0 0.0
    %152 = vmatprep.subr.mxu0 0.0
    %153 = vmatpush2.msra.mxu0 0.0
    %154 = vmatprep.subr.mxu0 0.0
    %155 = vmatpush2.msra.mxu0 0.0
    %156 = vmatprep.subr.mxu0 0.0
    %157 = vmatpush2.msra.mxu0 0.0
    %158 = vmatprep.subr.mxu0 0.0
    %159 = vmatpush2.msra.mxu0 0.0
    %160 = vmatprep.subr.mxu0 0.0
    %161 = vmatpush2.msra.mxu0 0.0
    %162 = vmatprep.subr.mxu0 0.0
    %163 = vmatpush2.msra.mxu0 0.0
    %164 = vmatprep.subr.mxu0 0.0
    %165 = vmatpush2.msra.mxu0 0.0
    %166 = vmatprep.subr.mxu0 0.0
    %167 = vmatpush2.msra.mxu0 0.0
    %168 = vmatprep.mubr.f32.mxu0 0.0
    %169 = vmatmul.mubr.f32.gmra.mxu0 %v80
    %v170 = vpop.f32.mrf.mxu0
    %v171 = vadd.f32 %v102, %v170
    %v172 = vpop.f32.mrf.mxu0
    %173 = vdwg.mxu0
    %v174 = vmul.f32 %v171, 0.5
    %v175 = vtanh.pop %v174
    %v176 = vadd.f32 %v175, 1.0
    %v177 = vmul.f32 %v176, 0.5
    %v178 = vld [vmem:[#allocation7] sm:$0xff]
    %v179 = vld [vmem:[#allocation7 + $0x8] sm:$0xff]
    %v180 = vld [vmem:[#allocation7 + $0x10] sm:$0xff]
    %v181 = vld [vmem:[#allocation7 + $0x18] sm:$0xff]
    %v182 = vld [vmem:[#allocation7 + $0x20] sm:$0xff]
    %v183 = vld [vmem:[#allocation7 + $0x28] sm:$0xff]
    %v184 = vld [vmem:[#allocation7 + $0x30] sm:$0xff]
    %v185 = vld [vmem:[#allocation7 + $0x38] sm:$0xff]
    %v186 = vld [vmem:[#allocation7 + $0x40] sm:$0xff]
    %v187 = vld [vmem:[#allocation7 + $0x48] sm:$0xff]
    %v188 = vld [vmem:[#allocation7 + $0x50] sm:$0xff]
    %v189 = vld [vmem:[#allocation7 + $0x58] sm:$0xff]
    %v190 = vld [vmem:[#allocation7 + $0x60] sm:$0xff]
    %v191 = vld [vmem:[#allocation7 + $0x68] sm:$0xff]
    %v192 = vld [vmem:[#allocation7 + $0x70] sm:$0xff]
    %v193 = vld [vmem:[#allocation7 + $0x78] sm:$0xff]
    %v194 = vld [vmem:[%s4] sm:$0x1]
    %v196 = vlaneseq
    %v197 = vshrl.u32 %v196, 7
    %v198 = vsub.s32 0, %v197
    %v199 = vrot.slane %v194, %v198
    %201 = vmatprep.subr.mxu0 0.0
    %202 = vmatpush1.msra.mxu0 %v193
    %203 = vmatprep.subr.mxu0 0.0
    %204 = vmatpush1.msra.mxu0 %v192
    %205 = vmatprep.subr.mxu0 0.0
    %206 = vmatpush1.msra.mxu0 %v191
    %207 = vmatprep.subr.mxu0 0.0
    %208 = vmatpush1.msra.mxu0 %v190
    %209 = vmatprep.subr.mxu0 0.0
    %210 = vmatpush1.msra.mxu0 %v189
    %211 = vmatprep.subr.mxu0 0.0
    %212 = vmatpush1.msra.mxu0 %v188
    %213 = vmatprep.subr.mxu0 0.0
    %214 = vmatpush1.msra.mxu0 %v187
    %215 = vmatprep.subr.mxu0 0.0
    %216 = vmatpush1.msra.mxu0 %v186
    %217 = vmatprep.subr.mxu0 0.0
    %218 = vmatpush1.msra.mxu0 %v185
    %219 = vmatprep.subr.mxu0 0.0
    %220 = vmatpush1.msra.mxu0 %v184
    %221 = vmatprep.subr.mxu0 0.0
    %222 = vmatpush1.msra.mxu0 %v183
    %223 = vmatprep.subr.mxu0 0.0
    %224 = vmatpush1.msra.mxu0 %v182
    %225 = vmatprep.subr.mxu0 0.0
    %226 = vmatpush1.msra.mxu0 %v181
    %227 = vmatprep.subr.mxu0 0.0
    %228 = vmatpush1.msra.mxu0 %v180
    %229 = vmatprep.subr.mxu0 0.0
    %230 = vmatpush1.msra.mxu0 %v179
    %231 = vmatprep.subr.mxu0 0.0
    %232 = vmatpush1.msra.mxu0 %v178
    %233 = vmatprep.subr.mxu0 0.0
    %234 = vmatpush2.msra.mxu0 0.0
    %235 = vmatprep.subr.mxu0 0.0
    %236 = vmatpush2.msra.mxu0 0.0
    %237 = vmatprep.subr.mxu0 0.0
    %238 = vmatpush2.msra.mxu0 0.0
    %239 = vmatprep.subr.mxu0 0.0
    %240 = vmatpush2.msra.mxu0 0.0
    %241 = vmatprep.subr.mxu0 0.0
    %242 = vmatpush2.msra.mxu0 0.0
    %243 = vmatprep.subr.mxu0 0.0
    %244 = vmatpush2.msra.mxu0 0.0
    %245 = vmatprep.subr.mxu0 0.0
    %246 = vmatpush2.msra.mxu0 0.0
    %247 = vmatprep.subr.mxu0 0.0
    %248 = vmatpush2.msra.mxu0 0.0
    %249 = vmatprep.subr.mxu0 0.0
    %250 = vmatpush2.msra.mxu0 0.0
    %251 = vmatprep.subr.mxu0 0.0
    %252 = vmatpush2.msra.mxu0 0.0
    %253 = vmatprep.subr.mxu0 0.0
    %254 = vmatpush2.msra.mxu0 0.0
    %255 = vmatprep.subr.mxu0 0.0
    %256 = vmatpush2.msra.mxu0 0.0
    %257 = vmatprep.subr.mxu0 0.0
    %258 = vmatpush2.msra.mxu0 0.0
    %259 = vmatprep.subr.mxu0 0.0
    %260 = vmatpush2.msra.mxu0 0.0
    %261 = vmatprep.subr.mxu0 0.0
    %262 = vmatpush2.msra.mxu0 0.0
    %263 = vmatprep.subr.mxu0 0.0
    %264 = vmatpush2.msra.mxu0 0.0
    %265 = vmatprep.mubr.f32.mxu0 0.0
    %266 = vmatmul.mubr.f32.gmra.mxu0 %v177
    %v267 = vpop.f32.mrf.mxu0
    %v268 = vadd.f32 %v199, %v267
    %v269 = vpop.f32.mrf.mxu0
    %270 = vdwg.mxu0
    %v271 = vmul.f32 %v268, 0.5
    %v272 = vtanh.pop %v271
    %v273 = vadd.f32 %v272, 1.0
    %v274 = vmul.f32 %v273, 0.5
    %v275 = vld [vmem:[#allocation8] sm:$0xff]
    %v276 = vld [vmem:[#allocation8 + $0x8] sm:$0xff]
    %v277 = vld [vmem:[#allocation8 + $0x10] sm:$0xff]
    %v278 = vld [vmem:[#allocation8 + $0x18] sm:$0xff]
    %v279 = vld [vmem:[#allocation8 + $0x20] sm:$0xff]
    %v280 = vld [vmem:[#allocation8 + $0x28] sm:$0xff]
    %v281 = vld [vmem:[#allocation8 + $0x30] sm:$0xff]
    %v282 = vld [vmem:[#allocation8 + $0x38] sm:$0xff]
    %v283 = vld [vmem:[#allocation8 + $0x40] sm:$0xff]
    %v284 = vld [vmem:[#allocation8 + $0x48] sm:$0xff]
    %v285 = vld [vmem:[#allocation8 + $0x50] sm:$0xff]
    %v286 = vld [vmem:[#allocation8 + $0x58] sm:$0xff]
    %v287 = vld [vmem:[#allocation8 + $0x60] sm:$0xff]
    %v288 = vld [vmem:[#allocation8 + $0x68] sm:$0xff]
    %v289 = vld [vmem:[#allocation8 + $0x70] sm:$0xff]
    %v290 = vld [vmem:[#allocation8 + $0x78] sm:$0xff]
    %v291 = vld [vmem:[%s6] sm:$0x1]
    %v293 = vlaneseq
    %v294 = vshrl.u32 %v293, 7
    %v295 = vsub.s32 0, %v294
    %v296 = vrot.slane %v291, %v295
    %298 = vmatprep.subr.mxu0 0.0
    %299 = vmatpush1.msra.mxu0 %v290
    %300 = vmatprep.subr.mxu0 0.0
    %301 = vmatpush1.msra.mxu0 %v289
    %302 = vmatprep.subr.mxu0 0.0
    %303 = vmatpush1.msra.mxu0 %v288
    %304 = vmatprep.subr.mxu0 0.0
    %305 = vmatpush1.msra.mxu0 %v287
    %306 = vmatprep.subr.mxu0 0.0
    %307 = vmatpush1.msra.mxu0 %v286
    %308 = vmatprep.subr.mxu0 0.0
    %309 = vmatpush1.msra.mxu0 %v285
    %310 = vmatprep.subr.mxu0 0.0
    %311 = vmatpush1.msra.mxu0 %v284
    %312 = vmatprep.subr.mxu0 0.0
    %313 = vmatpush1.msra.mxu0 %v283
    %314 = vmatprep.subr.mxu0 0.0
    %315 = vmatpush1.msra.mxu0 %v282
    %316 = vmatprep.subr.mxu0 0.0
    %317 = vmatpush1.msra.mxu0 %v281
    %318 = vmatprep.subr.mxu0 0.0
    %319 = vmatpush1.msra.mxu0 %v280
    %320 = vmatprep.subr.mxu0 0.0
    %321 = vmatpush1.msra.mxu0 %v279
    %322 = vmatprep.subr.mxu0 0.0
    %323 = vmatpush1.msra.mxu0 %v278
    %324 = vmatprep.subr.mxu0 0.0
    %325 = vmatpush1.msra.mxu0 %v277
    %326 = vmatprep.subr.mxu0 0.0
    %327 = vmatpush1.msra.mxu0 %v276
    %328 = vmatprep.subr.mxu0 0.0
    %329 = vmatpush1.msra.mxu0 %v275
    %330 = vmatprep.subr.mxu0 0.0
    %331 = vmatpush2.msra.mxu0 0.0
    %332 = vmatprep.subr.mxu0 0.0
    %333 = vmatpush2.msra.mxu0 0.0
    %334 = vmatprep.subr.mxu0 0.0
    %335 = vmatpush2.msra.mxu0 0.0
    %336 = vmatprep.subr.mxu0 0.0
    %337 = vmatpush2.msra.mxu0 0.0
    %338 = vmatprep.subr.mxu0 0.0
    %339 = vmatpush2.msra.mxu0 0.0
    %340 = vmatprep.subr.mxu0 0.0
    %341 = vmatpush2.msra.mxu0 0.0
    %342 = vmatprep.subr.mxu0 0.0
    %343 = vmatpush2.msra.mxu0 0.0
    %344 = vmatprep.subr.mxu0 0.0
    %345 = vmatpush2.msra.mxu0 0.0
    %346 = vmatprep.subr.mxu0 0.0
    %347 = vmatpush2.msra.mxu0 0.0
    %348 = vmatprep.subr.mxu0 0.0
    %349 = vmatpush2.msra.mxu0 0.0
    %350 = vmatprep.subr.mxu0 0.0
    %351 = vmatpush2.msra.mxu0 0.0
    %352 = vmatprep.subr.mxu0 0.0
    %353 = vmatpush2.msra.mxu0 0.0
    %354 = vmatprep.subr.mxu0 0.0
    %355 = vmatpush2.msra.mxu0 0.0
    %356 = vmatprep.subr.mxu0 0.0
    %357 = vmatpush2.msra.mxu0 0.0
    %358 = vmatprep.subr.mxu0 0.0
    %359 = vmatpush2.msra.mxu0 0.0
    %360 = vmatprep.subr.mxu0 0.0
    %361 = vmatpush2.msra.mxu0 0.0
    %362 = vmatprep.mubr.f32.mxu0 0.0
    %363 = vmatmul.mubr.f32.gmra.mxu0 %v274
    %v364 = vpop.f32.mrf.mxu0
    %v365 = vadd.f32 %v296, %v364
    %v366 = vpop.f32.mrf.mxu0
    %367 = vdwg.mxu0
    %368 = vst [vmem:[#allocation10] sm:$0xff] %v365
    // Predicated region
    $region46: #{tpu_custom_call.1} parent=1 // pred_check
      _
    $region47: #{tpu_custom_call.1} parent=1 // pred_check_branch
      %370 = sbr.rel (0) target = $region49
    $region48: #{tpu_custom_call.1} parent=1 // pred_region
      %s372 = ssub.s32 128, 128
      %373 = vsyncadd [#allocation4], %s372
      %s375 = sshll.u32 [#allocation10], 4
      %s376 = int_to_ptr.vmem [resolvable:$true] %s375
      %378 = dma.vmem_to_hbm [thread:$0]  %s376, 128, %s7, [#allocation4]
    $region49: #{tpu_custom_call.1} parent=1 // pred_fallthru
      _
    // Predicated region
    $region50: #{tpu_custom_call.1} parent=1 // pred_check
      _
    $region51: #{tpu_custom_call.1} parent=1 // pred_check_branch
      %380 = sbr.rel (0) target = $region53
    $region52: #{tpu_custom_call.1} parent=1 // pred_region
      %381 = dma.done [#allocation4], 128
    $region53: #{tpu_custom_call.1} parent=1 // pred_fallthru
      _
    %382 = vsyncpa [#allocation3], 1
    %383 = vsyncpa [#allocation6], 1
    %384 = vsyncpa [#allocation9], 1
    %385 = vsyncpa [#allocation4], 1

</llo_original>
